<compile_context>
chip_gen: v5e
topology: v5e:2x2
jax: 0.10.0
libtpu: 0.0.40
codegen_flags: <defaults>
</compile_context>

<pallas_src>
import jax
import jax.numpy as jnp
from jax.experimental import pallas as pl
from jax.experimental.pallas import tpu as pltpu


def _round_up(x, m):
    return ((x + m - 1) // m) * m


def _round_down(x, m):
    return (x // m) * m


def _vmem_cap():
    try:
        return int(pltpu.get_tpu_info().vmem_capacity_bytes)
    except Exception:
        return 64 * 1024 * 1024  # conservative fallback (v7x per-TC figure)


def _choose_v_tile(d_model, vocab, itemsize):
    """Lane-dense vocab tile (multiple of 128); keep the double-buffered W
    block <= ~1/3 of the VMEM budget so row_tile can stay large."""
    budget = int(_vmem_cap() * 0.55)
    v_tile = min(512, _round_up(vocab, 128))
    while v_tile > 128 and 2 * d_model * v_tile * itemsize > budget // 3:
        v_tile = max(128, _round_down(v_tile // 2, 128))
    return v_tile


def _choose_row_tile(rows, d_model, v_tile, itemsize):
    """VMEM-budget-derived row tile.  Aligned to 256 (MXU width) when rows
    permit; row_tile is the reuse factor for every W tile read from HBM."""
    budget = int(_vmem_cap() * 0.55)
    fixed = 2 * d_model * v_tile * itemsize + 2 * v_tile * 4   # W + bias (dbl-buf)
    per_row = (2 * d_model * itemsize      # x block (double-buffered)
               + 2 * v_tile * 4            # f32 logits output block (double-buffered)
               + 2 * v_tile * 4            # headroom for exp/max f32 temporaries
               + 32)                       # lse output + m/l scratch
    rows_r = _round_up(rows, 8)
    align = 256 if rows_r >= 256 else 8
    avail = max(budget - fixed, 8 * per_row)
    cand = max(8, min(1024, avail // per_row))
    if cand >= align:
        cand = _round_down(cand, align)
    else:
        cand = max(8, _round_down(cand, 8))
    cand = min(cand, rows_r)
    # Prefer >= 4 row-grid steps on large inputs (keeps both v7x TensorCores
    # busy with their own pipelines) but never shrink the W-reuse factor
    # below 512 rows for it.
    if rows_r >= 4 * 512:
        per4 = _round_down(rows_r // 4, 256)
        if per4 >= 512:
            cand = min(cand, per4)
    return max(8, cand), fixed, per_row


def prepare_projection_params(weight, bias, *, dtype=None, v_tile=None):
    """One-time parameter prep (hoist out of the per-call hot path).

    weight: (vocab, d_model) PyTorch nn.Linear layout; bias: (vocab,).
    Returns (wt, b2d, vocab, v_tile) where wt is (d_model, v_padded) in the
    compute dtype with zero-padded columns and b2d is (1, v_padded) f32 with
    -1e30 in the padded columns (so they contribute ~0 to the softmax sum).
    """
    vocab, d_model = int(weight.shape[0]), int(weight.shape[1])
    dtype = dtype if dtype is not None else weight.dtype
    if v_tile is None:
        v_tile = _choose_v_tile(d_model, vocab, jnp.dtype(dtype).itemsize)
    v_padded = _round_up(vocab, v_tile)

    wt = jnp.transpose(weight).astype(dtype)               # (d_model, vocab)
    b2d = bias.reshape(1, vocab).astype(jnp.float32)
    if v_padded != vocab:
        wt = jnp.pad(wt, ((0, 0), (0, v_padded - vocab)))
        b2d = jnp.pad(b2d, ((0, 0), (0, v_padded - vocab)), constant_values=-1e30)
    return wt, b2d, vocab, v_tile


def _logits_lse_kernel(x_ref, w_ref, b_ref, logits_ref, lse_ref, m_sc, l_sc):
    # x_ref: (TM, K), w_ref: (K, TV), b_ref: (1, TV),
    # logits_ref: (TM, TV) f32, lse_ref: (TM, 1) f32 (resident across vocab axis).
    j = pl.program_id(1)

    @pl.when(j == 0)
    def _():
        m_sc[...] = jnp.full_like(m_sc, -jnp.inf)
        l_sc[...] = jnp.zeros_like(l_sc)

    # Native-dtype operands (bf16 x bf16 -> f32 runs at full MXU rate).
    logits = jnp.dot(x_ref[...], w_ref[...], preferred_element_type=jnp.float32)
    logits = logits + b_ref[...]
    logits_ref[...] = logits

    # Online logsumexp update (exp on the EUP, max/sum on the XLU).
    m_prev = m_sc[...]
    m_new = jnp.maximum(m_prev, jnp.max(logits, axis=-1, keepdims=True))
    l_sc[...] = (jnp.exp(m_prev - m_new) * l_sc[...]
                 + jnp.sum(jnp.exp(logits - m_new), axis=-1, keepdims=True))
    m_sc[...] = m_new

    @pl.when(j == pl.num_programs(1) - 1)
    def _():
        lse_ref[...] = m_sc[...] + jnp.log(l_sc[...])


def _sub_lse_kernel(logits_ref, lse_ref, o_ref):
    o_ref[...] = (logits_ref[...] - lse_ref[...]).astype(o_ref.dtype)


def projection_layer_prepared(x, wt, b2d, vocab, v_tile, *, row_tile=None):
    """Hot path: log_softmax(x @ wt + b) with pre-transposed / pre-padded params."""
    orig_shape = x.shape
    d_model = int(orig_shape[-1])
    assert int(wt.shape[0]) == d_model, (wt.shape, d_model)
    v_padded = int(wt.shape[1])
    assert v_padded % v_tile == 0

    rows = 1
    for d in orig_shape[:-1]:
        rows *= int(d)
    x2d = x.reshape(rows, d_model)

    itemsize = jnp.dtype(x.dtype).itemsize
    out_dtype = x.dtype
    cap = _vmem_cap()

    auto_row_tile, fixed, per_row = _choose_row_tile(rows, d_model, v_tile, itemsize)
    if row_tile is None:
        row_tile = auto_row_tile

    rows_padded = _round_up(max(rows, row_tile), row_tile)
    if rows_padded != rows:
        x2d = jnp.concatenate(
            [x2d, jnp.zeros((rows_padded - rows, d_model), x2d.dtype)], axis=0
        )

    used = fixed + per_row * row_tile
    vmem_limit = int(min(cap, used + max(used // 4, 4 << 20)))

    grid = (rows_padded // row_tile, v_padded // v_tile)

    logits, lse = pl.pallas_call(
        _logits_lse_kernel,
        out_shape=(
            jax.ShapeDtypeStruct((rows_padded, v_padded), jnp.float32),
            jax.ShapeDtypeStruct((rows_padded, 1), jnp.float32),
        ),
        grid_spec=pltpu.PrefetchScalarGridSpec(
            num_scalar_prefetch=0,
            grid=grid,
            in_specs=[
                pl.BlockSpec((row_tile, d_model), lambda i, j: (i, 0)),   # x (resident over j)
                pl.BlockSpec((d_model, v_tile), lambda i, j: (0, j)),     # W^T tile
                pl.BlockSpec((1, v_tile), lambda i, j: (0, j)),           # bias tile
            ],
            out_specs=(
                pl.BlockSpec((row_tile, v_tile), lambda i, j: (i, j)),    # raw logits
                pl.BlockSpec((row_tile, 1), lambda i, j: (i, 0)),         # lse (accumulator)
            ),
            scratch_shapes=[
                pltpu.VMEM((row_tile, 1), jnp.float32),   # running max
                pltpu.VMEM((row_tile, 1), jnp.float32),   # running sum-exp
            ],
        ),
        compiler_params=pltpu.CompilerParams(
            dimension_semantics=("parallel", "arbitrary"),
            vmem_limit_bytes=vmem_limit,
        ),
        cost_estimate=pl.CostEstimate(
            flops=2 * rows_padded * d_model * v_padded,
            transcendentals=rows_padded * v_padded,
            bytes_accessed=(rows_padded * d_model * itemsize
                            + grid[0] * d_model * v_padded * itemsize
                            + rows_padded * v_padded * 4
                            + rows_padded * 4),
        ),
    )(x2d, wt, b2d)

    out_itemsize = jnp.dtype(out_dtype).itemsize
    p2_used = (2 * row_tile * v_tile * 4 + 2 * row_tile * 4
               + 2 * row_tile * v_tile * out_itemsize)
    p2_limit = int(min(cap, p2_used + (4 << 20)))

    out2d = pl.pallas_call(
        _sub_lse_kernel,
        out_shape=jax.ShapeDtypeStruct((rows_padded, v_padded), out_dtype),
        grid_spec=pltpu.PrefetchScalarGridSpec(
            num_scalar_prefetch=0,
            grid=grid,
            in_specs=[
                pl.BlockSpec((row_tile, v_tile), lambda i, j: (i, j)),
                pl.BlockSpec((row_tile, 1), lambda i, j: (i, 0)),
            ],
            out_specs=pl.BlockSpec((row_tile, v_tile), lambda i, j: (i, j)),
        ),
        compiler_params=pltpu.CompilerParams(
            dimension_semantics=("parallel", "parallel"),
            vmem_limit_bytes=p2_limit,
        ),
        cost_estimate=pl.CostEstimate(
            flops=rows_padded * v_padded,
            transcendentals=0,
            bytes_accessed=(rows_padded * v_padded * 4 + rows_padded * 4
                            + rows_padded * v_padded * out_itemsize),
        ),
    )(logits, lse)

    out2d = out2d[:rows, :vocab]
    return out2d.reshape(*orig_shape[:-1], vocab)


def projection_layer(x, weight, bias, *, row_tile=None, v_tile=None):
    """Matches ProjectionLayer.forward: log_softmax(x @ weight.T + bias, dim=-1)."""
    wt, b2d, vocab, v_tile = prepare_projection_params(
        weight, bias, dtype=x.dtype, v_tile=v_tile
    )
    return projection_layer_prepared(x, wt, b2d, vocab, v_tile, row_tile=row_tile)


if __name__ == "__main__":
    key = jax.random.PRNGKey(0)
    batch, seq, d_model, vocab_size = 2, 8, 32, 128
    kx, kw, kb = jax.random.split(key, 3)

    x = jax.random.normal(kx, (batch, seq, d_model), dtype=jnp.float32)
    # nn.Linear default init: U(-1/sqrt(d_model), 1/sqrt(d_model))
    bound = 1.0 / (d_model ** 0.5)
    weight = jax.random.uniform(
        kw, (vocab_size, d_model), jnp.float32, -bound, bound
    )
    bias = jax.random.uniform(kb, (vocab_size,), jnp.float32, -bound, bound)

    # One-time parameter prep (transpose / pad / cast) hoisted off the hot path.
    wt, b2d, vocab, v_tile = prepare_projection_params(weight, bias, dtype=x.dtype)

    out = projection_layer_prepared(x, wt, b2d, vocab, v_tile)
    out = jax.block_until_ready(out)

    # Plain-JAX reference.
    logits = x @ weight.T + bias
    ref = jax.nn.log_softmax(logits, axis=-1)
    assert out.shape == ref.shape, (out.shape, ref.shape)
    assert jnp.allclose(out, ref, atol=1e-3, rtol=1e-3), (
        "mismatch vs reference, max abs err = %f"
        % float(jnp.max(jnp.abs(out - ref)))
    )

    print("KERNEL_OK")
</pallas_src>

<mosaic_0001>
module attributes {stable_mosaic.version = 11 : i64} {
  func.func @_logits_lse_kernel(%arg0: i32, %arg1: i32, %arg2: memref<16x32xf32, #tpu.memory_space<vmem>>, %arg3: memref<32x128xf32, #tpu.memory_space<vmem>>, %arg4: memref<1x128xf32, #tpu.memory_space<vmem>>, %arg5: memref<16x128xf32, #tpu.memory_space<vmem>>, %arg6: memref<16x1xf32, #tpu.memory_space<vmem>>, %arg7: memref<16x1xf32, #tpu.memory_space<vmem>>, %arg8: memref<16x1xf32, #tpu.memory_space<vmem>>) attributes {dimension_semantics = [#tpu.dimension_semantics<parallel>, #tpu.dimension_semantics<arbitrary>], iteration_bounds = array<i64: 1, 1>, scalar_prefetch = 0 : i64, scratch_operands = 2 : i64, tpu.core_type = #tpu.core_type<tc>, window_params = [{transform_indices = @transform_0, window_bounds = array<i64: 16, 32>}, {transform_indices = @transform_1, window_bounds = array<i64: 32, 128>}, {transform_indices = @transform_2, window_bounds = array<i64: 1, 128>}, {transform_indices = @transform_3, window_bounds = array<i64: 16, 128>}, {transform_indices = @transform_4, window_bounds = array<i64: 16, 1>}]} {
    %c0_i32 = arith.constant 0 : i32
    %0 = arith.cmpi eq, %arg1, %c0_i32 : i32
    %1 = arith.extui %0 : i1 to i32
    %c0_i32_0 = arith.constant 0 : i32
    %2 = arith.cmpi ne, %1, %c0_i32_0 : i32
    scf.if %2 {
      %cst_20 = arith.constant 0xFF800000 : f32
      %29 = vector.broadcast %cst_20 : f32 to vector<16x1xf32>
      %c0_21 = arith.constant 0 : index
      %c0_22 = arith.constant 0 : index
      %30 = vector.load %arg7[%c0_21, %c0_22] : memref<16x1xf32, #tpu.memory_space<vmem>>, vector<16x1xf32>
      tpu.vector_store %arg7[%c0_21, %c0_22], %29 {strides = array<i32>} : memref<16x1xf32, #tpu.memory_space<vmem>>, vector<16x1xf32>,
      %cst_23 = arith.constant 0.000000e+00 : f32
      %31 = vector.broadcast %cst_23 : f32 to vector<16x1xf32>
      %c0_24 = arith.constant 0 : index
      %c0_25 = arith.constant 0 : index
      %32 = vector.load %arg8[%c0_24, %c0_25] : memref<16x1xf32, #tpu.memory_space<vmem>>, vector<16x1xf32>
      tpu.vector_store %arg8[%c0_24, %c0_25], %31 {strides = array<i32>} : memref<16x1xf32, #tpu.memory_space<vmem>>, vector<16x1xf32>,
    } else {
    }
    %c0 = arith.constant 0 : index
    %c0_1 = arith.constant 0 : index
    %3 = vector.load %arg2[%c0, %c0_1] : memref<16x32xf32, #tpu.memory_space<vmem>>, vector<16x32xf32>
    %c0_2 = arith.constant 0 : index
    %c0_3 = arith.constant 0 : index
    %4 = vector.load %arg3[%c0_2, %c0_3] : memref<32x128xf32, #tpu.memory_space<vmem>>, vector<32x128xf32>
    %cst = arith.constant dense<0.000000e+00> : vector<16x128xf32>
    %5 = tpu.matmul %3, %4, %cst {dimension_numbers = #tpu.dot_dimension_numbers<[1], [0], [0], [1], [0, 0, 1, 1], [], []>} : vector<16x32xf32>, vector<32x128xf32>, vector<16x128xf32> -> vector<16x128xf32>
    %c0_4 = arith.constant 0 : index
    %c0_5 = arith.constant 0 : index
    %6 = vector.load %arg4[%c0_4, %c0_5] : memref<1x128xf32, #tpu.memory_space<vmem>>, vector<1x128xf32>
    %7 = vector.broadcast %6 : vector<1x128xf32> to vector<16x128xf32>
    %8 = arith.addf %5, %7 : vector<16x128xf32>
    %c0_6 = arith.constant 0 : index
    %c0_7 = arith.constant 0 : index
    %9 = vector.load %arg5[%c0_6, %c0_7] : memref<16x128xf32, #tpu.memory_space<vmem>>, vector<16x128xf32>
    tpu.vector_store %arg5[%c0_6, %c0_7], %8 {strides = array<i32>} : memref<16x128xf32, #tpu.memory_space<vmem>>, vector<16x128xf32>,
    %c0_8 = arith.constant 0 : index
    %c0_9 = arith.constant 0 : index
    %10 = vector.load %arg7[%c0_8, %c0_9] : memref<16x1xf32, #tpu.memory_space<vmem>>, vector<16x1xf32>
    %cst_10 = arith.constant dense<0xFF800000> : vector<16xf32>
    %11 = vector.multi_reduction <maximumf>, %8, %cst_10 [1] : vector<16x128xf32> to vector<16xf32>
    %12 = vector.shape_cast %11 : vector<16xf32> to vector<16x1xf32>
    %13 = arith.maximumf %10, %12 : vector<16x1xf32>
    %14 = arith.subf %10, %13 : vector<16x1xf32>
    %15 = math.exp %14 : vector<16x1xf32>
    %c0_11 = arith.constant 0 : index
    %c0_12 = arith.constant 0 : index
    %16 = vector.load %arg8[%c0_11, %c0_12] : memref<16x1xf32, #tpu.memory_space<vmem>>, vector<16x1xf32>
    %17 = arith.mulf %15, %16 : vector<16x1xf32>
    %18 = vector.broadcast %13 : vector<16x1xf32> to vector<16x128xf32>
    %19 = arith.subf %8, %18 : vector<16x128xf32>
    %20 = math.exp %19 : vector<16x128xf32>
    %cst_13 = arith.constant dense<0.000000e+00> : vector<16xf32>
    %21 = vector.multi_reduction <add>, %20, %cst_13 [1] : vector<16x128xf32> to vector<16xf32>
    %22 = vector.shape_cast %21 : vector<16xf32> to vector<16x1xf32>
    %23 = arith.addf %17, %22 : vector<16x1xf32>
    %c0_14 = arith.constant 0 : index
    %c0_15 = arith.constant 0 : index
    %24 = vector.load %arg8[%c0_14, %c0_15] : memref<16x1xf32, #tpu.memory_space<vmem>>, vector<16x1xf32>
    tpu.vector_store %arg8[%c0_14, %c0_15], %23 {strides = array<i32>} : memref<16x1xf32, #tpu.memory_space<vmem>>, vector<16x1xf32>,
    %c0_16 = arith.constant 0 : index
    %c0_17 = arith.constant 0 : index
    %25 = vector.load %arg7[%c0_16, %c0_17] : memref<16x1xf32, #tpu.memory_space<vmem>>, vector<16x1xf32>
    tpu.vector_store %arg7[%c0_16, %c0_17], %13 {strides = array<i32>} : memref<16x1xf32, #tpu.memory_space<vmem>>, vector<16x1xf32>,
    %c0_i32_18 = arith.constant 0 : i32
    %26 = arith.cmpi eq, %arg1, %c0_i32_18 : i32
    %27 = arith.extui %26 : i1 to i32
    %c0_i32_19 = arith.constant 0 : i32
    %28 = arith.cmpi ne, %27, %c0_i32_19 : i32
    scf.if %28 {
      %c0_20 = arith.constant 0 : index
      %c0_21 = arith.constant 0 : index
      %29 = vector.load %arg7[%c0_20, %c0_21] : memref<16x1xf32, #tpu.memory_space<vmem>>, vector<16x1xf32>
      %c0_22 = arith.constant 0 : index
      %c0_23 = arith.constant 0 : index
      %30 = vector.load %arg8[%c0_22, %c0_23] : memref<16x1xf32, #tpu.memory_space<vmem>>, vector<16x1xf32>
      %31 = math.log %30 : vector<16x1xf32>
      %32 = arith.addf %29, %31 : vector<16x1xf32>
      %c0_24 = arith.constant 0 : index
      %c0_25 = arith.constant 0 : index
      %33 = vector.load %arg6[%c0_24, %c0_25] : memref<16x1xf32, #tpu.memory_space<vmem>>, vector<16x1xf32>
      tpu.vector_store %arg6[%c0_24, %c0_25], %32 {strides = array<i32>} : memref<16x1xf32, #tpu.memory_space<vmem>>, vector<16x1xf32>,
    } else {
    }
    return
  }
  func.func @transform_0(%arg0: i32, %arg1: i32) -> (i32, i32) {
    %c0_i32 = arith.constant 0 : i32
    %c0_i32_0 = arith.constant 0 : i32
    return %arg0, %c0_i32 : i32, i32
  }
  func.func @transform_1(%arg0: i32, %arg1: i32) -> (i32, i32) {
    %c0_i32 = arith.constant 0 : i32
    %c0_i32_0 = arith.constant 0 : i32
    return %c0_i32, %arg1 : i32, i32
  }
  func.func @transform_2(%arg0: i32, %arg1: i32) -> (i32, i32) {
    %c0_i32 = arith.constant 0 : i32
    %c0_i32_0 = arith.constant 0 : i32
    return %c0_i32, %arg1 : i32, i32
  }
  func.func @transform_3(%arg0: i32, %arg1: i32) -> (i32, i32) {
    %c0_i32 = arith.constant 0 : i32
    return %arg0, %arg1 : i32, i32
  }
  func.func @transform_4(%arg0: i32, %arg1: i32) -> (i32, i32) {
    %c0_i32 = arith.constant 0 : i32
    %c0_i32_0 = arith.constant 0 : i32
    return %arg0, %c0_i32 : i32, i32
  }
}

</mosaic_0001>

<llo_original>
// kernel: tpu_custom_call.1
$region0: #{tpu_custom_call.1}
  #allocation0 [shape = 'u32[]', space=smem, size = 0x4, offset = 0x4, fixed_abs, tag = 'smem constant byte address 0x4 - core index']
  #allocation1 [shape = 'u32[72,128]{1,0:T(1,128)}', space=vmem, size = 0x9000, scoped, tag = 'internal scratch']
  #allocation2 [shape = 'f32[16,1]{1,0:T(8,128)}', space=vmem, size = 0x2000, scoped, tag = 'scratch operand']
  #allocation3 [shape = 'f32[16,1]{1,0:T(8,128)}', space=vmem, size = 0x2000, scoped, tag = 'scratch operand']
  %s0 = inlined_call_operand.hbm [shape: f32[16,32], index: 0, kind: input, shape index: {}]
  %s1 = inlined_call_operand.hbm [shape: f32[32,128], index: 1, kind: input, shape index: {}]
  %s2 = inlined_call_operand.vmem [shape: f32[1,128], index: 2, kind: input, shape index: {}]
  %s3 = inlined_call_operand.hbm [shape: f32[16,128], index: 3, kind: output, shape index: {0}]
  %s4 = inlined_call_operand.vmem [shape: f32[16,1], index: 4, kind: output, shape index: {1}]
  %5 = xla_tuple %s3, %s4
  %s6 = sld [smem:[#allocation0]]
  $region46: #{tpu_custom_call.1} parent=0
    _
  %s8 = ssub.s32 1, %s6
  %s9 = scalar_select 0, %s8, %s6
  $region1: #{tpu_custom_call.1} parent=0
    #allocation4 [shape = 'u8[8192]{0}', space=vmem, size = 0x2000, scoped, tag = 'input window, operand 0, single buffered']
    #allocation5 [shape = 's32[1]{0}', space=sflag, size = 0x4, scoped, tag = 'scoped memory for tpu_custom_call.1']
    #allocation6 [shape = 's32[1]{0}', space=sflag, size = 0x4, scoped, tag = 'scoped memory for tpu_custom_call.1']
    #allocation7 [shape = 'u8[16384]{0}', space=vmem, size = 0x4000, scoped, tag = 'input window, operand 1, single buffered']
    #allocation8 [shape = 's32[1]{0}', space=sflag, size = 0x4, scoped, tag = 'scoped memory for tpu_custom_call.1']
    #allocation9 [shape = 'u8[8192]{0}', space=vmem, size = 0x2000, scoped, tag = 'output window, operand 0, single buffered']
    %10 = vsyncpa [#allocation5], 0
    %11 = vsyncpa [#allocation8], 0
    %12 = vsyncpa [#allocation6], 0
    // Predicated region
    $region2: #{tpu_custom_call.1} parent=1 // pred_check
      _
    $region3: #{tpu_custom_call.1} parent=1 // pred_check_branch
      %14 = sbr.rel (0) target = $region5
    $region4: #{tpu_custom_call.1} parent=1 // pred_region
      %16 = vsyncadd [#allocation5], 0
      %s17 = sshll.u32 %s0, 4
      %s18 = int_to_ptr.hbm [resolvable:$true] %s17
      %s19 = sshll.u32 [#allocation4], 4
      %s20 = int_to_ptr.vmem [resolvable:$true] %s19
      %25 = dma.hbm_to_vmem [thread:$0]  %s18, 256, %s20, [#allocation5], 128, 128, 8
    $region5: #{tpu_custom_call.1} parent=1 // pred_fallthru
      _
    // Predicated region
    $region6: #{tpu_custom_call.1} parent=1 // pred_check
      _
    $region7: #{tpu_custom_call.1} parent=1 // pred_check_branch
      %27 = sbr.rel (0) target = $region9
    $region8: #{tpu_custom_call.1} parent=1 // pred_region
      %29 = vsyncadd [#allocation8], 0
      %s30 = sshll.u32 %s1, 4
      %s31 = int_to_ptr.hbm [resolvable:$true] %s30
      %s32 = sshll.u32 [#allocation7], 4
      %s33 = int_to_ptr.vmem [resolvable:$true] %s32
      %38 = dma.hbm_to_vmem [thread:$0]  %s31, 512, %s33, [#allocation8], 128, 128, 8
    $region9: #{tpu_custom_call.1} parent=1 // pred_fallthru
      _
    // Predicated region
    $region10: #{tpu_custom_call.1} parent=1 // pred_check
      _
    $region11: #{tpu_custom_call.1} parent=1 // pred_check_branch
      %40 = sbr.rel (0) target = $region13
    $region12: #{tpu_custom_call.1} parent=1 // pred_region
      _
    $region13: #{tpu_custom_call.1} parent=1 // pred_fallthru
      _
    // Predicated region
    $region14: #{tpu_custom_call.1} parent=1 // pred_check
      _
    $region15: #{tpu_custom_call.1} parent=1 // pred_check_branch
      %42 = sbr.rel (0) target = $region17
    $region16: #{tpu_custom_call.1} parent=1 // pred_region
      %44 = dma.done [#allocation5], 256
    $region17: #{tpu_custom_call.1} parent=1 // pred_fallthru
      _
    // Predicated region
    $region18: #{tpu_custom_call.1} parent=1 // pred_check
      _
    $region19: #{tpu_custom_call.1} parent=1 // pred_check_branch
      %46 = sbr.rel (0) target = $region21
    $region20: #{tpu_custom_call.1} parent=1 // pred_region
      %48 = dma.done [#allocation8], 512
    $region21: #{tpu_custom_call.1} parent=1 // pred_fallthru
      _
    %p49 = scmp.eq.s32.totalorder 0, 0
    // Predicated region
    $region22: #{tpu_custom_call.1} parent=1 // pred_check
      %p50 = pneg %p49
    $region23: #{tpu_custom_call.1} parent=1 // pred_check_branch
      %52 = sbr.rel (%p50) target = $region25
    $region24: #{tpu_custom_call.1} parent=1 // pred_region
      %vm53 = vcmask 7168
      %54 = vst.msk [vmem:[#allocation2] sm:$0xff] %vm53, -inf
      %55 = vst.msk [vmem:[#allocation2 + $0x8] sm:$0xff] %vm53, -inf
      %56 = vst.msk [vmem:[#allocation3] sm:$0xff] %vm53, 0.0
      %57 = vst.msk [vmem:[#allocation3 + $0x8] sm:$0xff] %vm53, 0.0
    $region25: #{tpu_custom_call.1} parent=1 // pred_fallthru
      _
    %v58 = vld [vmem:[#allocation4] sm:$0xff]
    %v59 = vld [vmem:[#allocation4 + $0x8] sm:$0xff]
    %v60 = vld [vmem:[#allocation7] sm:$0xff]
    %v61 = vld [vmem:[#allocation7 + $0x8] sm:$0xff]
    %v62 = vld [vmem:[#allocation7 + $0x10] sm:$0xff]
    %v63 = vld [vmem:[#allocation7 + $0x18] sm:$0xff]
    %v64 = vld [vmem:[%s2] sm:$0x1]
    %v66 = vperm.slane %v64, 0
    %vm68 = vcmask 261120
    %v70 = vsel %vm68, %v58, 0
    %v73 = vsel %vm68, %v59, 0
    %75 = vmatpush.msra.mxu0 0.0
    %76 = vmatpush.msra.mxu0 0.0
    %77 = vmatpush.msra.mxu0 0.0
    %78 = vmatpush.msra.mxu0 0.0
    %79 = vmatpush.msra.mxu0 0.0
    %80 = vmatpush.msra.mxu0 0.0
    %81 = vmatpush.msra.mxu0 0.0
    %82 = vmatpush.msra.mxu0 0.0
    %83 = vmatpush.msra.mxu0 0.0
    %84 = vmatpush.msra.mxu0 0.0
    %85 = vmatpush.msra.mxu0 0.0
    %86 = vmatpush.msra.mxu0 0.0
    %87 = vmatpush.msra.mxu0 %v63
    %88 = vmatpush.msra.mxu0 %v62
    %89 = vmatpush.msra.mxu0 %v61
    %90 = vmatpush.msra.mxu0 %v60
    %91 = vmatmul.f32.gmra.mxu0 %v70
    %v92 = vpop.f32.mrf.mxu0
    %v93 = vadd.f32 %v66, %v92
    %94 = vmatmul.f32.gmra.mxu0 %v73
    %v95 = vpop.f32.mrf.mxu0
    %v96 = vadd.f32 %v66, %v95
    %97 = vdwg.mxu0
    %98 = vst [vmem:[#allocation9] sm:$0xff] %v93
    %99 = vst [vmem:[#allocation9 + $0x8] sm:$0xff] %v96
    %v100 = vld [vmem:[#allocation2] sm:$0xff]
    %v101 = vld [vmem:[#allocation2 + $0x8] sm:$0xff]
    %102 = vmax.xlane.f32.xlu0 %v93
    %v103 = vpop.xlane.xlu0 %102
    %104 = vmax.xlane.f32.xlu0 %v96
    %v105 = vpop.xlane.xlu0 %104
    %v106 = vmax.f32 %v100, %v103
    %v107 = vmax.f32 %v101, %v105
    %v108 = vsub.f32 %v100, %v106
    %v109 = vsub.f32 %v101, %v107
    %v110 = vmul.f32 %v108, 1.442695
    %v111 = vpow.pop %v110
    %v112 = vmul.f32 %v109, 1.442695
    %v113 = vpow.pop %v112
    %v114 = vld [vmem:[#allocation3] sm:$0xff]
    %v115 = vld [vmem:[#allocation3 + $0x8] sm:$0xff]
    %v116 = vmul.f32 %v111, %v114
    %v117 = vmul.f32 %v113, %v115
    %119 = vset.pattern.permute.xlu0 0
    %120 = vperm.xlu0 %119, %v106
    %v121 = vpop.permute.xlu0 %120
    %124 = vset.pattern.permute.xlu0 0
    %125 = vperm.xlu0 %124, %v107
    %v126 = vpop.permute.xlu0 %125
    %v128 = vsub.f32 %v93, %v121
    %v129 = vsub.f32 %v96, %v126
    %v130 = vmul.f32 %v128, 1.442695
    %v131 = vpow.pop %v130
    %v132 = vmul.f32 %v129, 1.442695
    %v133 = vpow.pop %v132
    %134 = vadd.xlane.f32.xlu0 %v131
    %v135 = vpop.xlane.xlu0 %134
    %136 = vadd.xlane.f32.xlu0 %v133
    %v137 = vpop.xlane.xlu0 %136
    %v138 = vadd.f32 %v116, %v135
    %v139 = vadd.f32 %v117, %v137
    %vm140 = vcmask 7168
    %141 = vst.msk [vmem:[#allocation3] sm:$0xff] %vm140, %v138
    %142 = vst.msk [vmem:[#allocation3 + $0x8] sm:$0xff] %vm140, %v139
    %143 = vst.msk [vmem:[#allocation2] sm:$0xff] %vm140, %v106
    %144 = vst.msk [vmem:[#allocation2 + $0x8] sm:$0xff] %vm140, %v107
    // Predicated region
    $region26: #{tpu_custom_call.1} parent=1 // pred_check
      %p145 = pneg %p49
    $region27: #{tpu_custom_call.1} parent=1 // pred_check_branch
      %147 = sbr.rel (%p145) target = $region29
    $region28: #{tpu_custom_call.1} parent=1 // pred_region
      %v148 = vld [vmem:[#allocation2] sm:$0xff]
      %v149 = vld [vmem:[#allocation2 + $0x8] sm:$0xff]
      %v150 = vld [vmem:[#allocation3] sm:$0xff]
      %v151 = vld [vmem:[#allocation3 + $0x8] sm:$0xff]
      %v152 = vlog2.pop %v150
      %v153 = vmul.f32 %v152, 0.6931472
      %v154 = vlog2.pop %v151
      %v155 = vmul.f32 %v154, 0.6931472
      %v156 = vadd.f32 %v148, %v153
      %v157 = vadd.f32 %v149, %v155
      %158 = vst.msk [vmem:[%s4] sm:$0xff] %vm140, %v156
      %159 = vst.msk [vmem:[%s4 + $0x8] sm:$0xff] %vm140, %v157
    $region29: #{tpu_custom_call.1} parent=1 // pred_fallthru
      _
    // Predicated region
    $region30: #{tpu_custom_call.1} parent=1 // pred_check
      _
    $region31: #{tpu_custom_call.1} parent=1 // pred_check_branch
      %161 = sbr.rel (0) target = $region33
    $region32: #{tpu_custom_call.1} parent=1 // pred_region
      %163 = vsyncadd [#allocation6], 0
      %s164 = sshll.u32 [#allocation9], 4
      %s165 = int_to_ptr.vmem [resolvable:$true] %s164
      %s166 = sshll.u32 %s3, 4
      %s167 = int_to_ptr.hbm [resolvable:$true] %s166
      %172 = dma.vmem_to_hbm [thread:$0]  %s165, 256, %s167, [#allocation6], 128, 128, 8
    $region33: #{tpu_custom_call.1} parent=1 // pred_fallthru
      _
    // Predicated region
    $region34: #{tpu_custom_call.1} parent=1 // pred_check
      _
    $region35: #{tpu_custom_call.1} parent=1 // pred_check_branch
      %174 = sbr.rel (0) target = $region37
    $region36: #{tpu_custom_call.1} parent=1 // pred_region
      _
    $region37: #{tpu_custom_call.1} parent=1 // pred_fallthru
      _
    // Predicated region
    $region38: #{tpu_custom_call.1} parent=1 // pred_check
      _
    $region39: #{tpu_custom_call.1} parent=1 // pred_check_branch
      %176 = sbr.rel (0) target = $region41
    $region40: #{tpu_custom_call.1} parent=1 // pred_region
      %178 = dma.done [#allocation6], 256
    $region41: #{tpu_custom_call.1} parent=1 // pred_fallthru
      _
    // Predicated region
    $region42: #{tpu_custom_call.1} parent=1 // pred_check
      _
    $region43: #{tpu_custom_call.1} parent=1 // pred_check_branch
      %180 = sbr.rel (0) target = $region45
    $region44: #{tpu_custom_call.1} parent=1 // pred_region
      _
    $region45: #{tpu_custom_call.1} parent=1 // pred_fallthru
      _
    %181 = vsyncpa [#allocation5], 1
    %182 = vsyncpa [#allocation8], 1
    %183 = vsyncpa [#allocation6], 1

</llo_original>
